<compile_context>
chip_gen: v6e
topology: v6e:2x2x1
jax: 0.10.0
libtpu: 0.0.40
codegen_flags: <defaults>
</compile_context>

<pallas_src>
import jax
import jax.numpy as jnp
from jax.experimental import pallas as pl
from jax.experimental.pallas import tpu as pltpu


def _round_up(n, m):
    return ((n + m - 1) // m) * m


def _fcn_kernel(x_ref, w1_ref, b1_ref, w2_ref, b2_ref, w3_ref, b3_ref,
                o_ref, h2_ref):
    # Grid = (batch tiles, fc3 feature tiles).  fc1/fc2 depend only on the
    # batch tile, so compute them once per batch tile (feature axis is inner).
    @pl.when(pl.program_id(1) == 0)
    def _():
        x = x_ref[...]                                              # bf16 tile
        h1 = jnp.dot(x, w1_ref[...],
                     preferred_element_type=jnp.float32) + b1_ref[...]
        h1 = jnp.maximum(h1, 0.0).astype(jnp.bfloat16)
        h2 = jnp.dot(h1, w2_ref[...],
                     preferred_element_type=jnp.float32) + b2_ref[...]
        h2_ref[...] = jnp.maximum(h2, 0.0).astype(jnp.bfloat16)

    # fc3 on the current (H2p, TN) weight slab; lane-dense f32 store.
    o_ref[...] = (jnp.dot(h2_ref[...], w3_ref[...],
                          preferred_element_type=jnp.float32)
                  + b3_ref[...]).astype(o_ref.dtype)


def pack_params(params, input_size):
    """One-time packing: zero-pad to lane-dense shapes, cast weights to bf16."""
    D = int(input_size)
    Dp = _round_up(D, 128)
    H1 = 128
    H2 = 64
    H2p = _round_up(H2, 128)

    w1 = jnp.zeros((Dp, H1), jnp.bfloat16).at[:D, :].set(
        params["w1"].astype(jnp.bfloat16))
    b1 = params["b1"].reshape(1, H1).astype(jnp.float32)
    w2 = jnp.zeros((H1, H2p), jnp.bfloat16).at[:, :H2].set(
        params["w2"].astype(jnp.bfloat16))
    b2 = jnp.zeros((1, H2p), jnp.float32).at[:, :H2].set(
        params["b2"].reshape(1, H2).astype(jnp.float32))
    w3 = jnp.zeros((H2p, Dp), jnp.bfloat16).at[:H2, :D].set(
        params["w3"].astype(jnp.bfloat16))
    b3 = jnp.zeros((1, Dp), jnp.float32).at[:, :D].set(
        params["b3"].reshape(1, D).astype(jnp.float32))

    return {"D": D, "Dp": Dp, "H1": H1, "H2p": H2p,
            "w1": w1, "b1": b1, "w2": w2, "b2": b2, "w3": w3, "b3": b3}


def stress_strain_fcn(x, packed, *, max_block_b=256):
    """x: (B, H, W) float32 -> (B, H*W) float32 (matches PyTorch module)."""
    B = x.shape[0]
    D, Dp = packed["D"], packed["Dp"]
    H1, H2p = packed["H1"], packed["H2p"]
    assert x.shape[1] * x.shape[2] == D

    SUB = 16                               # bf16 sublane packing for batch tiles
    B_al = _round_up(B, SUB)

    # ---- generation-aware VMEM budget ----
    try:
        vmem_cap = int(pltpu.get_tpu_info().vmem_capacity_bytes)
    except Exception:                      # conservative fallback (v7x-sized)
        vmem_cap = 64 * 1024 * 1024
    budget = int(0.70 * vmem_cap)

    def vmem_bytes(tb, tn):
        # Weights/biases are VMEM-resident but still double-buffered by the
        # default BlockSpec pipelining, so count them twice.
        w_bytes = 2 * (2 * (Dp * H1 + H1 * H2p + H2p * tn)
                       + 4 * (H1 + H2p + tn))
        io_bytes = 2 * (tb * Dp * 2 + tb * tn * 4)   # dbl-buffered bf16 x + f32 out
        act_bytes = tb * (4 * H1 + 4 * H2p            # f32 h1 / h2 intermediates
                          + 2 * H2p                   # bf16 h2 scratch
                          + 4 * tn)                   # f32 fc3 accumulator
        return w_bytes + io_bytes + act_bytes

    # ---- pick batch tile TB and fc3 feature tile TN ----
    TB = min(_round_up(max_block_b, SUB), B_al)
    TN = Dp
    tb_floor = min(TB, 128)
    while vmem_bytes(TB, TN) > budget and TB > tb_floor:
        TB = max(tb_floor, _round_up(TB // 2, SUB))
    if vmem_bytes(TB, TN) > budget:
        # Tile the fc3 output features (TN must divide Dp) before shrinking TB
        # below 128.
        m = Dp // 128
        for nblk in range(2, m + 1):
            if m % nblk:
                continue
            TN = Dp // nblk
            if vmem_bytes(TB, TN) <= budget:
                break
    while vmem_bytes(TB, TN) > budget and TB > SUB:
        TB = max(SUB, _round_up(TB // 2, SUB))

    # Prefer a TB that divides the aligned batch (avoids Bp >> B), unless that
    # would more than halve the tile.
    q = B_al // SUB
    d = min(TB // SUB, q)
    while d > 1 and q % d:
        d -= 1
    if SUB * d * 2 >= TB:
        TB = SUB * d
    Bp = _round_up(B_al, TB)

    # Megacore (v7x): give the "parallel" batch axis >= 2 steps when possible.
    if Bp // TB == 1 and Bp >= 2 * SUB:
        half = Bp // 2
        TB = half if half % SUB == 0 else SUB

    grid = (Bp // TB, Dp // TN)

    # ---- pad / cast x (skip entirely when already aligned) ----
    xf = x.reshape(B, D).astype(jnp.bfloat16)
    padded = (Bp, Dp) != (B, D)
    if padded:
        xf = jnp.pad(xf, ((0, Bp - B), (0, Dp - D)))

    full = lambda arr: pl.BlockSpec(arr.shape, lambda i, j: (0, 0))
    in_specs = [
        pl.BlockSpec((TB, Dp), lambda i, j: (i, 0)),      # x: tiled over batch
        full(packed["w1"]), full(packed["b1"]),           # fc1 resident
        full(packed["w2"]), full(packed["b2"]),           # fc2 resident
        pl.BlockSpec((H2p, TN), lambda i, j: (0, j)),     # fc3 weight slab
        pl.BlockSpec((1, TN), lambda i, j: (0, j)),       # fc3 bias slab
    ]
    out_specs = pl.BlockSpec((TB, TN), lambda i, j: (i, j))

    flops = 2 * Bp * (Dp * H1 + H1 * H2p + H2p * Dp)
    bytes_accessed = (Bp * Dp * 2                               # bf16 x read
                      + Bp * Dp * 4                             # f32 out write
                      + 2 * (Dp * H1 + H1 * H2p)                # resident weights
                      + (Bp // TB) * 2 * H2p * Dp               # fc3 slabs re-walked
                      + 4 * (H1 + H2p + Dp))                    # biases
    vmem_limit = int(min(max(int(1.25 * vmem_bytes(TB, TN)), 32 * 1024 * 1024),
                         int(0.85 * vmem_cap)))

    out = pl.pallas_call(
        _fcn_kernel,
        out_shape=jax.ShapeDtypeStruct((Bp, Dp), jnp.float32),
        grid=grid,
        in_specs=in_specs,
        out_specs=out_specs,
        scratch_shapes=[pltpu.VMEM((TB, H2p), jnp.bfloat16)],   # h2 per batch tile
        compiler_params=pltpu.CompilerParams(
            dimension_semantics=("parallel", "arbitrary"),
            vmem_limit_bytes=vmem_limit,
        ),
        cost_estimate=pl.CostEstimate(
            flops=flops, transcendentals=0, bytes_accessed=bytes_accessed),
    )(xf, packed["w1"], packed["b1"], packed["w2"], packed["b2"],
      packed["w3"], packed["b3"])

    return out[:B, :D] if padded else out


def init_params(key, input_size):
    """Deterministic synthetic init with the same shapes as the PyTorch module."""
    ks = jax.random.split(key, 6)

    def lin(kw, kb, n_in, n_out):
        # Stored as (in, out); bias kept 2-D (1, out) for clean TPU broadcasting.
        w = (jax.random.normal(kw, (n_in, n_out), dtype=jnp.float32)
             * (1.0 / jnp.sqrt(jnp.float32(n_in))))
        b = jax.random.normal(kb, (1, n_out), dtype=jnp.float32) * 0.01
        return w, b

    w1, b1 = lin(ks[0], ks[1], input_size, 128)
    w2, b2 = lin(ks[2], ks[3], 128, 64)
    w3, b3 = lin(ks[4], ks[5], 64, input_size)
    return {"w1": w1, "b1": b1, "w2": w2, "b2": b2, "w3": w3, "b3": b3}


def reference_forward(x, params):
    """Pure-JAX reference mirroring the kernel's numeric path (bf16 matmul
    operands, f32 accumulation, f32 bias/ReLU)."""
    B = x.shape[0]
    xf = x.reshape(B, -1)
    bf = jnp.bfloat16
    h1 = jnp.maximum(
        jnp.dot(xf.astype(bf), params["w1"].astype(bf),
                preferred_element_type=jnp.float32) + params["b1"], 0.0)
    h2 = jnp.maximum(
        jnp.dot(h1.astype(bf), params["w2"].astype(bf),
                preferred_element_type=jnp.float32) + params["b2"], 0.0)
    return (jnp.dot(h2.astype(bf), params["w3"].astype(bf),
                    preferred_element_type=jnp.float32) + params["b3"])


if __name__ == "__main__":
    key = jax.random.PRNGKey(0)
    k_x, k_p = jax.random.split(key)

    # sigma-like input: (batch, H, W) = (2, 8, 8) -> input_size = 64
    B, H, W = 2, 8, 8
    input_size = H * W
    x = jax.random.normal(k_x, (B, H, W), dtype=jnp.float32)

    params = init_params(k_p, input_size)
    packed = pack_params(params, input_size)            # one-time packing

    out = jax.block_until_ready(stress_strain_fcn(x, packed))

    ref = reference_forward(x, params)
    assert out.shape == (B, input_size)
    max_err = float(jnp.max(jnp.abs(out - ref)))
    assert jnp.allclose(out, ref, atol=1e-3, rtol=1e-3), max_err

    print("KERNEL_OK")
</pallas_src>

<mosaic_0001>
module attributes {stable_mosaic.version = 11 : i64} {
  func.func @_fcn_kernel(%arg0: i32, %arg1: i32, %arg2: memref<16x128xbf16, #tpu.memory_space<vmem>>, %arg3: memref<128x128xbf16, #tpu.memory_space<vmem>>, %arg4: memref<1x128xf32, #tpu.memory_space<vmem>>, %arg5: memref<128x128xbf16, #tpu.memory_space<vmem>>, %arg6: memref<1x128xf32, #tpu.memory_space<vmem>>, %arg7: memref<128x128xbf16, #tpu.memory_space<vmem>>, %arg8: memref<1x128xf32, #tpu.memory_space<vmem>>, %arg9: memref<16x128xf32, #tpu.memory_space<vmem>>, %arg10: memref<16x128xbf16, #tpu.memory_space<vmem>>) attributes {dimension_semantics = [#tpu.dimension_semantics<parallel>, #tpu.dimension_semantics<arbitrary>], iteration_bounds = array<i64: 1, 1>, scalar_prefetch = 0 : i64, scratch_operands = 1 : i64, tpu.core_type = #tpu.core_type<tc>, window_params = [{transform_indices = @transform_0, window_bounds = array<i64: 16, 128>}, {pipeline_mode = #tpu.pipeline_mode<synchronous>, transform_indices = @transform_1, window_bounds = array<i64: 128, 128>}, {pipeline_mode = #tpu.pipeline_mode<synchronous>, transform_indices = @transform_2, window_bounds = array<i64: 1, 128>}, {pipeline_mode = #tpu.pipeline_mode<synchronous>, transform_indices = @transform_3, window_bounds = array<i64: 128, 128>}, {pipeline_mode = #tpu.pipeline_mode<synchronous>, transform_indices = @transform_4, window_bounds = array<i64: 1, 128>}, {transform_indices = @transform_5, window_bounds = array<i64: 128, 128>}, {transform_indices = @transform_6, window_bounds = array<i64: 1, 128>}, {transform_indices = @transform_7, window_bounds = array<i64: 16, 128>}]} {
    %c0_i32 = arith.constant 0 : i32
    %0 = arith.cmpi eq, %arg1, %c0_i32 : i32
    %1 = arith.extui %0 : i1 to i32
    %c0_i32_0 = arith.constant 0 : i32
    %2 = arith.cmpi ne, %1, %c0_i32_0 : i32
    scf.if %2 {
      %c0_8 = arith.constant 0 : index
      %c0_9 = arith.constant 0 : index
      %10 = vector.load %arg2[%c0_8, %c0_9] : memref<16x128xbf16, #tpu.memory_space<vmem>>, vector<16x128xbf16>
      %c0_10 = arith.constant 0 : index
      %c0_11 = arith.constant 0 : index
      %11 = vector.load %arg3[%c0_10, %c0_11] : memref<128x128xbf16, #tpu.memory_space<vmem>>, vector<128x128xbf16>
      %cst_12 = arith.constant dense<0.000000e+00> : vector<16x128xf32>
      %12 = tpu.matmul %10, %11, %cst_12 {dimension_numbers = #tpu.dot_dimension_numbers<[1], [0], [0], [1], [0, 0, 1, 1], [], []>} : vector<16x128xbf16>, vector<128x128xbf16>, vector<16x128xf32> -> vector<16x128xf32>
      %c0_13 = arith.constant 0 : index
      %c0_14 = arith.constant 0 : index
      %13 = vector.load %arg4[%c0_13, %c0_14] : memref<1x128xf32, #tpu.memory_space<vmem>>, vector<1x128xf32>
      %14 = vector.broadcast %13 : vector<1x128xf32> to vector<16x128xf32>
      %15 = arith.addf %12, %14 : vector<16x128xf32>
      %cst_15 = arith.constant 0.000000e+00 : f32
      %16 = vector.broadcast %cst_15 : f32 to vector<16x128xf32>
      %17 = arith.maximumf %15, %16 : vector<16x128xf32>
      %18 = arith.truncf %17 : vector<16x128xf32> to vector<16x128xbf16>
      %c0_16 = arith.constant 0 : index
      %c0_17 = arith.constant 0 : index
      %19 = vector.load %arg5[%c0_16, %c0_17] : memref<128x128xbf16, #tpu.memory_space<vmem>>, vector<128x128xbf16>
      %cst_18 = arith.constant dense<0.000000e+00> : vector<16x128xf32>
      %20 = tpu.matmul %18, %19, %cst_18 {dimension_numbers = #tpu.dot_dimension_numbers<[1], [0], [0], [1], [0, 0, 1, 1], [], []>} : vector<16x128xbf16>, vector<128x128xbf16>, vector<16x128xf32> -> vector<16x128xf32>
      %c0_19 = arith.constant 0 : index
      %c0_20 = arith.constant 0 : index
      %21 = vector.load %arg6[%c0_19, %c0_20] : memref<1x128xf32, #tpu.memory_space<vmem>>, vector<1x128xf32>
      %22 = vector.broadcast %21 : vector<1x128xf32> to vector<16x128xf32>
      %23 = arith.addf %20, %22 : vector<16x128xf32>
      %cst_21 = arith.constant 0.000000e+00 : f32
      %24 = vector.broadcast %cst_21 : f32 to vector<16x128xf32>
      %25 = arith.maximumf %23, %24 : vector<16x128xf32>
      %26 = arith.truncf %25 : vector<16x128xf32> to vector<16x128xbf16>
      %c0_22 = arith.constant 0 : index
      %c0_23 = arith.constant 0 : index
      %27 = vector.load %arg10[%c0_22, %c0_23] : memref<16x128xbf16, #tpu.memory_space<vmem>>, vector<16x128xbf16>
      tpu.vector_store %arg10[%c0_22, %c0_23], %26 {strides = array<i32>} : memref<16x128xbf16, #tpu.memory_space<vmem>>, vector<16x128xbf16>,
    } else {
    }
    %c0 = arith.constant 0 : index
    %c0_1 = arith.constant 0 : index
    %3 = vector.load %arg10[%c0, %c0_1] : memref<16x128xbf16, #tpu.memory_space<vmem>>, vector<16x128xbf16>
    %c0_2 = arith.constant 0 : index
    %c0_3 = arith.constant 0 : index
    %4 = vector.load %arg7[%c0_2, %c0_3] : memref<128x128xbf16, #tpu.memory_space<vmem>>, vector<128x128xbf16>
    %cst = arith.constant dense<0.000000e+00> : vector<16x128xf32>
    %5 = tpu.matmul %3, %4, %cst {dimension_numbers = #tpu.dot_dimension_numbers<[1], [0], [0], [1], [0, 0, 1, 1], [], []>} : vector<16x128xbf16>, vector<128x128xbf16>, vector<16x128xf32> -> vector<16x128xf32>
    %c0_4 = arith.constant 0 : index
    %c0_5 = arith.constant 0 : index
    %6 = vector.load %arg8[%c0_4, %c0_5] : memref<1x128xf32, #tpu.memory_space<vmem>>, vector<1x128xf32>
    %7 = vector.broadcast %6 : vector<1x128xf32> to vector<16x128xf32>
    %8 = arith.addf %5, %7 : vector<16x128xf32>
    %c0_6 = arith.constant 0 : index
    %c0_7 = arith.constant 0 : index
    %9 = vector.load %arg9[%c0_6, %c0_7] : memref<16x128xf32, #tpu.memory_space<vmem>>, vector<16x128xf32>
    tpu.vector_store %arg9[%c0_6, %c0_7], %8 {strides = array<i32>} : memref<16x128xf32, #tpu.memory_space<vmem>>, vector<16x128xf32>,
    return
  }
  func.func @transform_0(%arg0: i32, %arg1: i32) -> (i32, i32) {
    %c0_i32 = arith.constant 0 : i32
    %c0_i32_0 = arith.constant 0 : i32
    return %arg0, %c0_i32 : i32, i32
  }
  func.func @transform_1(%arg0: i32, %arg1: i32) -> (i32, i32) {
    %c0_i32 = arith.constant 0 : i32
    %c0_i32_0 = arith.constant 0 : i32
    %c0_i32_1 = arith.constant 0 : i32
    return %c0_i32, %c0_i32_0 : i32, i32
  }
  func.func @transform_2(%arg0: i32, %arg1: i32) -> (i32, i32) {
    %c0_i32 = arith.constant 0 : i32
    %c0_i32_0 = arith.constant 0 : i32
    %c0_i32_1 = arith.constant 0 : i32
    return %c0_i32, %c0_i32_0 : i32, i32
  }
  func.func @transform_3(%arg0: i32, %arg1: i32) -> (i32, i32) {
    %c0_i32 = arith.constant 0 : i32
    %c0_i32_0 = arith.constant 0 : i32
    %c0_i32_1 = arith.constant 0 : i32
    return %c0_i32, %c0_i32_0 : i32, i32
  }
  func.func @transform_4(%arg0: i32, %arg1: i32) -> (i32, i32) {
    %c0_i32 = arith.constant 0 : i32
    %c0_i32_0 = arith.constant 0 : i32
    %c0_i32_1 = arith.constant 0 : i32
    return %c0_i32, %c0_i32_0 : i32, i32
  }
  func.func @transform_5(%arg0: i32, %arg1: i32) -> (i32, i32) {
    %c0_i32 = arith.constant 0 : i32
    %c0_i32_0 = arith.constant 0 : i32
    return %c0_i32, %arg1 : i32, i32
  }
  func.func @transform_6(%arg0: i32, %arg1: i32) -> (i32, i32) {
    %c0_i32 = arith.constant 0 : i32
    %c0_i32_0 = arith.constant 0 : i32
    return %c0_i32, %arg1 : i32, i32
  }
  func.func @transform_7(%arg0: i32, %arg1: i32) -> (i32, i32) {
    %c0_i32 = arith.constant 0 : i32
    return %arg0, %arg1 : i32, i32
  }
}

</mosaic_0001>

<llo_original>
// kernel: tpu_custom_call.1
$region0: #{tpu_custom_call.1}
  #allocation0 [shape = 'u32[]', space=smem, size = 0x4, offset = 0x4, fixed_abs, tag = 'smem constant byte address 0x4 - core index']
  #allocation1 [shape = 'u32[144,128]{1,0:T(1,128)}', space=vmem, size = 0x12000, scoped, tag = 'internal scratch']
  #allocation2 [shape = 'bf16[16,128]{1,0:T(8,128)(2,1)}', space=vmem, size = 0x1000, scoped, tag = 'scratch operand']
  %s0 = inlined_call_operand.hbm [shape: bf16[16,128], index: 0, kind: input, shape index: {}]
  %s1 = inlined_call_operand.hbm [shape: bf16[128,128], index: 1, kind: input, shape index: {}]
  %s2 = inlined_call_operand.vmem [shape: f32[1,128], index: 2, kind: input, shape index: {}]
  %s3 = inlined_call_operand.hbm [shape: bf16[128,128], index: 3, kind: input, shape index: {}]
  %s4 = inlined_call_operand.vmem [shape: f32[1,128], index: 4, kind: input, shape index: {}]
  %s5 = inlined_call_operand.hbm [shape: bf16[128,128], index: 5, kind: input, shape index: {}]
  %s6 = inlined_call_operand.vmem [shape: f32[1,128], index: 6, kind: input, shape index: {}]
  %s7 = inlined_call_operand.hbm [shape: f32[16,128], index: 7, kind: output, shape index: {}]
  %s8 = sld [smem:[#allocation0]]
  $region58: #{tpu_custom_call.1} parent=0
    _
  %s10 = ssub.s32 1, %s8
  %s11 = scalar_select 0, %s10, %s8
  $region1: #{tpu_custom_call.1} parent=0
    #allocation3 [shape = 'u8[4096]{0}', space=vmem, size = 0x1000, scoped, tag = 'input window, operand 0, single buffered']
    #allocation4 [shape = 's32[1]{0}', space=sflag, size = 0x4, scoped, tag = 'scoped memory for tpu_custom_call.1']
    #allocation5 [shape = 's32[1]{0}', space=sflag, size = 0x4, scoped, tag = 'scoped memory for tpu_custom_call.1']
    #allocation6 [shape = 'u8[32768]{0}', space=vmem, size = 0x8000, scoped, tag = 'input window, operand 1, single buffered']
    #allocation7 [shape = 's32[1]{0}', space=sflag, size = 0x4, scoped, tag = 'scoped memory for tpu_custom_call.1']
    #allocation8 [shape = 'u8[32768]{0}', space=vmem, size = 0x8000, scoped, tag = 'input window, operand 3, single buffered']
    #allocation9 [shape = 'u8[32768]{0}', space=vmem, size = 0x8000, scoped, tag = 'input window, operand 5, single buffered']
    #allocation10 [shape = 's32[1]{0}', space=sflag, size = 0x4, scoped, tag = 'scoped memory for tpu_custom_call.1']
    #allocation11 [shape = 'u8[8192]{0}', space=vmem, size = 0x2000, scoped, tag = 'output window, operand 0, single buffered']
    %12 = vsyncpa [#allocation4], 0
    %13 = vsyncpa [#allocation7], 0
    %14 = vsyncpa [#allocation10], 0
    %15 = vsyncpa [#allocation5], 0
    // Predicated region
    $region2: #{tpu_custom_call.1} parent=1 // pred_check
      _
    $region3: #{tpu_custom_call.1} parent=1 // pred_check_branch
      %17 = sbr.rel (0) target = $region5
    $region4: #{tpu_custom_call.1} parent=1 // pred_region
      %s19 = ssub.s32 128, 128
      %20 = vsyncadd [#allocation4], %s19
      %s21 = sshll.u32 [#allocation3], 4
      %s22 = int_to_ptr.vmem [resolvable:$true] %s21
      %27 = dma.hbm_to_vmem [thread:$0]  %s0, 128, %s22, [#allocation4], 64, 64, 4
    $region5: #{tpu_custom_call.1} parent=1 // pred_fallthru
      _
    // Predicated region
    $region6: #{tpu_custom_call.1} parent=1 // pred_check
      _
    $region7: #{tpu_custom_call.1} parent=1 // pred_check_branch
      %29 = sbr.rel (0) target = $region9
    $region8: #{tpu_custom_call.1} parent=1 // pred_region
      %s31 = ssub.s32 1024, 1024
      %32 = vsyncadd [#allocation7], %s31
      %s33 = sshll.u32 [#allocation6], 4
      %s34 = int_to_ptr.vmem [resolvable:$true] %s33
      %39 = dma.hbm_to_vmem [thread:$0]  %s1, 1024, %s34, [#allocation7], 64, 64, 4
    $region9: #{tpu_custom_call.1} parent=1 // pred_fallthru
      _
    // Predicated region
    $region10: #{tpu_custom_call.1} parent=1 // pred_check
      _
    $region11: #{tpu_custom_call.1} parent=1 // pred_check_branch
      %41 = sbr.rel (0) target = $region13
    $region12: #{tpu_custom_call.1} parent=1 // pred_region
      _
    $region13: #{tpu_custom_call.1} parent=1 // pred_fallthru
      _
    // Predicated region
    $region14: #{tpu_custom_call.1} parent=1 // pred_check
      _
    $region15: #{tpu_custom_call.1} parent=1 // pred_check_branch
      %43 = sbr.rel (0) target = $region17
    $region16: #{tpu_custom_call.1} parent=1 // pred_region
      %s45 = ssub.s32 1024, 1024
      %46 = vsyncadd [#allocation7], %s45
      %s47 = sshll.u32 [#allocation8], 4
      %s48 = int_to_ptr.vmem [resolvable:$true] %s47
      %53 = dma.hbm_to_vmem [thread:$0]  %s3, 1024, %s48, [#allocation7], 64, 64, 4
    $region17: #{tpu_custom_call.1} parent=1 // pred_fallthru
      _
    // Predicated region
    $region18: #{tpu_custom_call.1} parent=1 // pred_check
      _
    $region19: #{tpu_custom_call.1} parent=1 // pred_check_branch
      %55 = sbr.rel (0) target = $region21
    $region20: #{tpu_custom_call.1} parent=1 // pred_region
      _
    $region21: #{tpu_custom_call.1} parent=1 // pred_fallthru
      _
    // Predicated region
    $region22: #{tpu_custom_call.1} parent=1 // pred_check
      _
    $region23: #{tpu_custom_call.1} parent=1 // pred_check_branch
      %57 = sbr.rel (0) target = $region25
    $region24: #{tpu_custom_call.1} parent=1 // pred_region
      %s59 = ssub.s32 1024, 1024
      %60 = vsyncadd [#allocation10], %s59
      %s61 = sshll.u32 [#allocation9], 4
      %s62 = int_to_ptr.vmem [resolvable:$true] %s61
      %67 = dma.hbm_to_vmem [thread:$0]  %s5, 1024, %s62, [#allocation10], 64, 64, 4
    $region25: #{tpu_custom_call.1} parent=1 // pred_fallthru
      _
    // Predicated region
    $region26: #{tpu_custom_call.1} parent=1 // pred_check
      _
    $region27: #{tpu_custom_call.1} parent=1 // pred_check_branch
      %69 = sbr.rel (0) target = $region29
    $region28: #{tpu_custom_call.1} parent=1 // pred_region
      _
    $region29: #{tpu_custom_call.1} parent=1 // pred_fallthru
      _
    // Predicated region
    $region30: #{tpu_custom_call.1} parent=1 // pred_check
      _
    $region31: #{tpu_custom_call.1} parent=1 // pred_check_branch
      %71 = sbr.rel (0) target = $region33
    $region32: #{tpu_custom_call.1} parent=1 // pred_region
      %72 = dma.done [#allocation4], 128
    $region33: #{tpu_custom_call.1} parent=1 // pred_fallthru
      _
    // Predicated region
    $region34: #{tpu_custom_call.1} parent=1 // pred_check
      _
    $region35: #{tpu_custom_call.1} parent=1 // pred_check_branch
      %74 = sbr.rel (0) target = $region37
    $region36: #{tpu_custom_call.1} parent=1 // pred_region
      %75 = dma.done [#allocation7], 1024
    $region37: #{tpu_custom_call.1} parent=1 // pred_fallthru
      _
    // Predicated region
    $region38: #{tpu_custom_call.1} parent=1 // pred_check
      _
    $region39: #{tpu_custom_call.1} parent=1 // pred_check_branch
      %77 = sbr.rel (0) target = $region41
    $region40: #{tpu_custom_call.1} parent=1 // pred_region
      %78 = dma.done [#allocation7], 1024
    $region41: #{tpu_custom_call.1} parent=1 // pred_fallthru
      _
    // Predicated region
    $region42: #{tpu_custom_call.1} parent=1 // pred_check
      _
    $region43: #{tpu_custom_call.1} parent=1 // pred_check_branch
      %80 = sbr.rel (0) target = $region45
    $region44: #{tpu_custom_call.1} parent=1 // pred_region
      %81 = dma.done [#allocation10], 1024
    $region45: #{tpu_custom_call.1} parent=1 // pred_fallthru
      _
    %p83 = scmp.eq.s32.totalorder 0, 0
    // Predicated region
    $region46: #{tpu_custom_call.1} parent=1 // pred_check
      %p84 = pneg %p83
    $region47: #{tpu_custom_call.1} parent=1 // pred_check_branch
      %86 = sbr.rel (%p84) target = $region49
    $region48: #{tpu_custom_call.1} parent=1 // pred_region
      %v87 = vld [vmem:[#allocation3] sm:$0xf]
      %v88 = vld [vmem:[#allocation3 + $0x4] sm:$0xf]
      %v89 = vld [vmem:[#allocation6] sm:$0xf]
      %v90 = vld [vmem:[#allocation6 + $0x4] sm:$0xf]
      %v91 = vld [vmem:[#allocation6 + $0x8] sm:$0xf]
      %v92 = vld [vmem:[#allocation6 + $0xc] sm:$0xf]
      %v93 = vld [vmem:[#allocation6 + $0x10] sm:$0xf]
      %v94 = vld [vmem:[#allocation6 + $0x14] sm:$0xf]
      %v95 = vld [vmem:[#allocation6 + $0x18] sm:$0xf]
      %v96 = vld [vmem:[#allocation6 + $0x1c] sm:$0xf]
      %v97 = vld [vmem:[#allocation6 + $0x20] sm:$0xf]
      %v98 = vld [vmem:[#allocation6 + $0x24] sm:$0xf]
      %v99 = vld [vmem:[#allocation6 + $0x28] sm:$0xf]
      %v100 = vld [vmem:[#allocation6 + $0x2c] sm:$0xf]
      %v101 = vld [vmem:[#allocation6 + $0x30] sm:$0xf]
      %v102 = vld [vmem:[#allocation6 + $0x34] sm:$0xf]
      %v103 = vld [vmem:[#allocation6 + $0x38] sm:$0xf]
      %v104 = vld [vmem:[#allocation6 + $0x3c] sm:$0xf]
      %v105 = vld [vmem:[%s2] sm:$0x1]
      %v107 = vlaneseq
      %v108 = vshrl.u32 %v107, 7
      %v109 = vsub.s32 0, %v108
      %v110 = vrot.slane %v105, %v109
      %v114 = vunpack.c.l.b16 %v87
      %v115 = vunpack.c.l.b16 %v88
      %v116 = vpack.c.b16 %v115, %v114
      %v134 = vunpack.c.l.b16 %v89
      %v135 = vunpack.c.l.b16 %v90
      %v136 = vunpack.c.l.b16 %v91
      %v137 = vunpack.c.l.b16 %v92
      %v138 = vunpack.c.l.b16 %v93
      %v139 = vunpack.c.l.b16 %v94
      %v140 = vunpack.c.l.b16 %v95
      %v141 = vunpack.c.l.b16 %v96
      %v142 = vunpack.c.l.b16 %v97
      %v143 = vunpack.c.l.b16 %v98
      %v144 = vunpack.c.l.b16 %v99
      %v145 = vunpack.c.l.b16 %v100
      %v146 = vunpack.c.l.b16 %v101
      %v147 = vunpack.c.l.b16 %v102
      %v148 = vunpack.c.l.b16 %v103
      %v149 = vunpack.c.l.b16 %v104
      %v150 = vpack.c.b16 %v135, %v134
      %v151 = vpack.c.b16 %v137, %v136
      %v152 = vpack.c.b16 %v139, %v138
      %v153 = vpack.c.b16 %v141, %v140
      %v154 = vpack.c.b16 %v143, %v142
      %v155 = vpack.c.b16 %v145, %v144
      %v156 = vpack.c.b16 %v147, %v146
      %v157 = vpack.c.b16 %v149, %v148
      %166 = vmatprep.subr.bf16.mxu0 0
      %167 = vmatpush1.bf16.msra.mxu0 %v157
      %168 = vmatprep.subr.bf16.mxu0 0
      %169 = vmatpush1.bf16.msra.mxu0 %v156
      %170 = vmatprep.subr.bf16.mxu0 0
      %171 = vmatpush1.bf16.msra.mxu0 %v155
      %172 = vmatprep.subr.bf16.mxu0 0
      %173 = vmatpush1.bf16.msra.mxu0 %v154
      %174 = vmatprep.subr.bf16.mxu0 0
      %175 = vmatpush1.bf16.msra.mxu0 %v153
      %176 = vmatprep.subr.bf16.mxu0 0
      %177 = vmatpush1.bf16.msra.mxu0 %v152
      %178 = vmatprep.subr.bf16.mxu0 0
      %179 = vmatpush1.bf16.msra.mxu0 %v151
      %180 = vmatprep.subr.bf16.mxu0 0
      %181 = vmatpush1.bf16.msra.mxu0 %v150
      %182 = vmatprep.subr.bf16.mxu0 0
      %183 = vmatpush2.bf16.msra.mxu0 0
      %184 = vmatprep.subr.bf16.mxu0 0
      %185 = vmatpush2.bf16.msra.mxu0 0
      %186 = vmatprep.subr.bf16.mxu0 0
      %187 = vmatpush2.bf16.msra.mxu0 0
      %188 = vmatprep.subr.bf16.mxu0 0
      %189 = vmatpush2.bf16.msra.mxu0 0
      %190 = vmatprep.subr.bf16.mxu0 0
      %191 = vmatpush2.bf16.msra.mxu0 0
      %192 = vmatprep.subr.bf16.mxu0 0
      %193 = vmatpush2.bf16.msra.mxu0 0
      %194 = vmatprep.subr.bf16.mxu0 0
      %195 = vmatpush2.bf16.msra.mxu0 0
      %196 = vmatprep.subr.bf16.mxu0 0
      %197 = vmatpush2.bf16.msra.mxu0 0
      %198 = vmatprep.mubr.bf16.mxu0 0
      %199 = vmatmul.mubr.bf16.gmra.mxu0 %v116
      %v200 = vpop.f32.mrf.mxu0
      %v201 = vadd.f32 %v110, %v200
      %v202 = vpop.f32.mrf.mxu0
      %v203 = vpop.f32.mrf.mxu0
      %v204 = vadd.f32 %v110, %v203
      %v205 = vpop.f32.mrf.mxu0
      %206 = vdwg.mxu0
      %v207 = vmax.f32 %v201, 0.0
      %v208 = vmax.f32 %v204, 0.0
      %v209 = vpack.c.bf16 %v208, %v207
      %v210 = vld [vmem:[#allocation8] sm:$0xf]
      %v211 = vld [vmem:[#allocation8 + $0x4] sm:$0xf]
      %v212 = vld [vmem:[#allocation8 + $0x8] sm:$0xf]
      %v213 = vld [vmem:[#allocation8 + $0xc] sm:$0xf]
      %v214 = vld [vmem:[#allocation8 + $0x10] sm:$0xf]
      %v215 = vld [vmem:[#allocation8 + $0x14] sm:$0xf]
      %v216 = vld [vmem:[#allocation8 + $0x18] sm:$0xf]
      %v217 = vld [vmem:[#allocation8 + $0x1c] sm:$0xf]
      %v218 = vld [vmem:[#allocation8 + $0x20] sm:$0xf]
      %v219 = vld [vmem:[#allocation8 + $0x24] sm:$0xf]
      %v220 = vld [vmem:[#allocation8 + $0x28] sm:$0xf]
      %v221 = vld [vmem:[#allocation8 + $0x2c] sm:$0xf]
      %v222 = vld [vmem:[#allocation8 + $0x30] sm:$0xf]
      %v223 = vld [vmem:[#allocation8 + $0x34] sm:$0xf]
      %v224 = vld [vmem:[#allocation8 + $0x38] sm:$0xf]
      %v225 = vld [vmem:[#allocation8 + $0x3c] sm:$0xf]
      %v226 = vld [vmem:[%s4] sm:$0x1]
      %v228 = vlaneseq
      %v229 = vshrl.u32 %v228, 7
      %v230 = vsub.s32 0, %v229
      %v231 = vrot.slane %v226, %v230
      %v249 = vunpack.c.l.b16 %v210
      %v250 = vunpack.c.l.b16 %v211
      %v251 = vunpack.c.l.b16 %v212
      %v252 = vunpack.c.l.b16 %v213
      %v253 = vunpack.c.l.b16 %v214
      %v254 = vunpack.c.l.b16 %v215
      %v255 = vunpack.c.l.b16 %v216
      %v256 = vunpack.c.l.b16 %v217
      %v257 = vunpack.c.l.b16 %v218
      %v258 = vunpack.c.l.b16 %v219
      %v259 = vunpack.c.l.b16 %v220
      %v260 = vunpack.c.l.b16 %v221
      %v261 = vunpack.c.l.b16 %v222
      %v262 = vunpack.c.l.b16 %v223
      %v263 = vunpack.c.l.b16 %v224
      %v264 = vunpack.c.l.b16 %v225
      %v265 = vpack.c.b16 %v250, %v249
      %v266 = vpack.c.b16 %v252, %v251
      %v267 = vpack.c.b16 %v254, %v253
      %v268 = vpack.c.b16 %v256, %v255
      %v269 = vpack.c.b16 %v258, %v257
      %v270 = vpack.c.b16 %v260, %v259
      %v271 = vpack.c.b16 %v262, %v261
      %v272 = vpack.c.b16 %v264, %v263
      %281 = vmatprep.subr.bf16.mxu0 0
      %282 = vmatpush1.bf16.msra.mxu0 %v272
      %283 = vmatprep.subr.bf16.mxu0 0
      %284 = vmatpush1.bf16.msra.mxu0 %v271
      %285 = vmatprep.subr.bf16.mxu0 0
      %286 = vmatpush1.bf16.msra.mxu0 %v270
      %287 = vmatprep.subr.bf16.mxu0 0
      %288 = vmatpush1.bf16.msra.mxu0 %v269
      %289 = vmatprep.subr.bf16.mxu0 0
      %290 = vmatpush1.bf16.msra.mxu0 %v268
      %291 = vmatprep.subr.bf16.mxu0 0
      %292 = vmatpush1.bf16.msra.mxu0 %v267
      %293 = vmatprep.subr.bf16.mxu0 0
      %294 = vmatpush1.bf16.msra.mxu0 %v266
      %295 = vmatprep.subr.bf16.mxu0 0
      %296 = vmatpush1.bf16.msra.mxu0 %v265
      %297 = vmatprep.subr.bf16.mxu0 0
      %298 = vmatpush2.bf16.msra.mxu0 0
      %299 = vmatprep.subr.bf16.mxu0 0
      %300 = vmatpush2.bf16.msra.mxu0 0
      %301 = vmatprep.subr.bf16.mxu0 0
      %302 = vmatpush2.bf16.msra.mxu0 0
      %303 = vmatprep.subr.bf16.mxu0 0
      %304 = vmatpush2.bf16.msra.mxu0 0
      %305 = vmatprep.subr.bf16.mxu0 0
      %306 = vmatpush2.bf16.msra.mxu0 0
      %307 = vmatprep.subr.bf16.mxu0 0
      %308 = vmatpush2.bf16.msra.mxu0 0
      %309 = vmatprep.subr.bf16.mxu0 0
      %310 = vmatpush2.bf16.msra.mxu0 0
      %311 = vmatprep.subr.bf16.mxu0 0
      %312 = vmatpush2.bf16.msra.mxu0 0
      %313 = vmatprep.mubr.bf16.mxu0 0
      %314 = vmatmul.mubr.bf16.gmra.mxu0 %v209
      %v315 = vpop.f32.mrf.mxu0
      %v316 = vadd.f32 %v231, %v315
      %v317 = vpop.f32.mrf.mxu0
      %v318 = vpop.f32.mrf.mxu0
      %v319 = vadd.f32 %v231, %v318
      %v320 = vpop.f32.mrf.mxu0
      %321 = vdwg.mxu0
      %v322 = vmax.f32 %v316, 0.0
      %v323 = vmax.f32 %v319, 0.0
      %v324 = vpack.c.bf16 %v323, %v322
      %v326 = vunpack.c.l.b16 %v324
      %v327 = vunpack.c.h.b16 %v324
      %v328 = vpack.c.b16 %v326, %v326
      %v329 = vpack.c.b16 %v327, %v327
      %332 = vst [vmem:[#allocation2] sm:$0xf] %v328
      %333 = vst [vmem:[#allocation2 + $0x4] sm:$0xf] %v329
    $region49: #{tpu_custom_call.1} parent=1 // pred_fallthru
      _
    %v334 = vld [vmem:[#allocation2] sm:$0xf]
    %v335 = vld [vmem:[#allocation2 + $0x4] sm:$0xf]
    %v336 = vld [vmem:[#allocation9] sm:$0xf]
    %v337 = vld [vmem:[#allocation9 + $0x4] sm:$0xf]
    %v338 = vld [vmem:[#allocation9 + $0x8] sm:$0xf]
    %v339 = vld [vmem:[#allocation9 + $0xc] sm:$0xf]
    %v340 = vld [vmem:[#allocation9 + $0x10] sm:$0xf]
    %v341 = vld [vmem:[#allocation9 + $0x14] sm:$0xf]
    %v342 = vld [vmem:[#allocation9 + $0x18] sm:$0xf]
    %v343 = vld [vmem:[#allocation9 + $0x1c] sm:$0xf]
    %v344 = vld [vmem:[#allocation9 + $0x20] sm:$0xf]
    %v345 = vld [vmem:[#allocation9 + $0x24] sm:$0xf]
    %v346 = vld [vmem:[#allocation9 + $0x28] sm:$0xf]
    %v347 = vld [vmem:[#allocation9 + $0x2c] sm:$0xf]
    %v348 = vld [vmem:[#allocation9 + $0x30] sm:$0xf]
    %v349 = vld [vmem:[#allocation9 + $0x34] sm:$0xf]
    %v350 = vld [vmem:[#allocation9 + $0x38] sm:$0xf]
    %v351 = vld [vmem:[#allocation9 + $0x3c] sm:$0xf]
    %v352 = vld [vmem:[%s6] sm:$0x1]
    %v354 = vlaneseq
    %v355 = vshrl.u32 %v354, 7
    %v356 = vsub.s32 0, %v355
    %v357 = vrot.slane %v352, %v356
    %v361 = vunpack.c.l.b16 %v334
    %v362 = vunpack.c.l.b16 %v335
    %v363 = vpack.c.b16 %v362, %v361
    %v381 = vunpack.c.l.b16 %v336
    %v382 = vunpack.c.l.b16 %v337
    %v383 = vunpack.c.l.b16 %v338
    %v384 = vunpack.c.l.b16 %v339
    %v385 = vunpack.c.l.b16 %v340
    %v386 = vunpack.c.l.b16 %v341
    %v387 = vunpack.c.l.b16 %v342
    %v388 = vunpack.c.l.b16 %v343
    %v389 = vunpack.c.l.b16 %v344
    %v390 = vunpack.c.l.b16 %v345
    %v391 = vunpack.c.l.b16 %v346
    %v392 = vunpack.c.l.b16 %v347
    %v393 = vunpack.c.l.b16 %v348
    %v394 = vunpack.c.l.b16 %v349
    %v395 = vunpack.c.l.b16 %v350
    %v396 = vunpack.c.l.b16 %v351
    %v397 = vpack.c.b16 %v382, %v381
    %v398 = vpack.c.b16 %v384, %v383
    %v399 = vpack.c.b16 %v386, %v385
    %v400 = vpack.c.b16 %v388, %v387
    %v401 = vpack.c.b16 %v390, %v389
    %v402 = vpack.c.b16 %v392, %v391
    %v403 = vpack.c.b16 %v394, %v393
    %v404 = vpack.c.b16 %v396, %v395
    %413 = vmatprep.subr.bf16.mxu0 0
    %414 = vmatpush1.bf16.msra.mxu0 %v404
    %415 = vmatprep.subr.bf16.mxu0 0
    %416 = vmatpush1.bf16.msra.mxu0 %v403
    %417 = vmatprep.subr.bf16.mxu0 0
    %418 = vmatpush1.bf16.msra.mxu0 %v402
    %419 = vmatprep.subr.bf16.mxu0 0
    %420 = vmatpush1.bf16.msra.mxu0 %v401
    %421 = vmatprep.subr.bf16.mxu0 0
    %422 = vmatpush1.bf16.msra.mxu0 %v400
    %423 = vmatprep.subr.bf16.mxu0 0
    %424 = vmatpush1.bf16.msra.mxu0 %v399
    %425 = vmatprep.subr.bf16.mxu0 0
    %426 = vmatpush1.bf16.msra.mxu0 %v398
    %427 = vmatprep.subr.bf16.mxu0 0
    %428 = vmatpush1.bf16.msra.mxu0 %v397
    %429 = vmatprep.subr.bf16.mxu0 0
    %430 = vmatpush2.bf16.msra.mxu0 0
    %431 = vmatprep.subr.bf16.mxu0 0
    %432 = vmatpush2.bf16.msra.mxu0 0
    %433 = vmatprep.subr.bf16.mxu0 0
    %434 = vmatpush2.bf16.msra.mxu0 0
    %435 = vmatprep.subr.bf16.mxu0 0
    %436 = vmatpush2.bf16.msra.mxu0 0
    %437 = vmatprep.subr.bf16.mxu0 0
    %438 = vmatpush2.bf16.msra.mxu0 0
    %439 = vmatprep.subr.bf16.mxu0 0
    %440 = vmatpush2.bf16.msra.mxu0 0
    %441 = vmatprep.subr.bf16.mxu0 0
    %442 = vmatpush2.bf16.msra.mxu0 0
    %443 = vmatprep.subr.bf16.mxu0 0
    %444 = vmatpush2.bf16.msra.mxu0 0
    %445 = vmatprep.mubr.bf16.mxu0 0
    %446 = vmatmul.mubr.bf16.gmra.mxu0 %v363
    %v447 = vpop.f32.mrf.mxu0
    %v448 = vadd.f32 %v357, %v447
    %v449 = vpop.f32.mrf.mxu0
    %v450 = vpop.f32.mrf.mxu0
    %v451 = vadd.f32 %v357, %v450
    %v452 = vpop.f32.mrf.mxu0
    %453 = vdwg.mxu0
    %454 = vst [vmem:[#allocation11] sm:$0xff] %v448
    %455 = vst [vmem:[#allocation11 + $0x8] sm:$0xff] %v451
    // Predicated region
    $region50: #{tpu_custom_call.1} parent=1 // pred_check
      _
    $region51: #{tpu_custom_call.1} parent=1 // pred_check_branch
      %457 = sbr.rel (0) target = $region53
    $region52: #{tpu_custom_call.1} parent=1 // pred_region
      %s459 = ssub.s32 256, 256
      %460 = vsyncadd [#allocation5], %s459
      %s461 = sshll.u32 [#allocation11], 4
      %s462 = int_to_ptr.vmem [resolvable:$true] %s461
      %467 = dma.vmem_to_hbm [thread:$0]  %s462, 256, %s7, [#allocation5], 128, 128, 8
    $region53: #{tpu_custom_call.1} parent=1 // pred_fallthru
      _
    // Predicated region
    $region54: #{tpu_custom_call.1} parent=1 // pred_check
      _
    $region55: #{tpu_custom_call.1} parent=1 // pred_check_branch
      %469 = sbr.rel (0) target = $region57
    $region56: #{tpu_custom_call.1} parent=1 // pred_region
      %470 = dma.done [#allocation5], 256
    $region57: #{tpu_custom_call.1} parent=1 // pred_fallthru
      _
    %471 = vsyncpa [#allocation4], 1
    %472 = vsyncpa [#allocation7], 1
    %473 = vsyncpa [#allocation10], 1
    %474 = vsyncpa [#allocation5], 1

</llo_original>
